<compile_context>
chip_gen: v7x
topology: tpu7x:2x2x1
jax: 0.10.0
libtpu: 0.0.40
codegen_flags: <defaults>
</compile_context>

<pallas_src>
import functools
import math

import jax
import jax.numpy as jnp
from jax.experimental import pallas as pl
from jax.experimental.pallas import tpu as pltpu


DEFAULT_TILE_N = 512  # 2 bufs x 512 rows x D x 2B (bf16) stays far under v7x VMEM


def _round_up(x, m):
    return ((x + m - 1) // m) * m


def _pcl_loss_kernel(anchor_ref, other_ref, w1a_ref, w1b_ref, b1_ref,
                     w2_ref, b2_ref, w3_ref, b3_ref, out_ref, acc_ref,
                     *, tile_n, n_total, matmul_dtype):
    """One row-tile of the fused MLP + BCEWithLogits (reduction='sum') loss.

    anchor : [1, D]        f32 (VMEM resident)
    other  : [tile_n, D]   matmul_dtype; row 0 of the global array = positive,
                           remaining rows = negatives (torch.cat order)
    w1a    : [D, H1p]      f32, anchor half of fc[0]
    w1b    : [D, H1p]      matmul_dtype, other half of fc[0]
    b1     : [1, H1p]      f32
    w2     : [H1p, H2p]    matmul_dtype
    b2     : [1, H2p]      f32
    w3     : [1, H2p]      f32 (last_layer weight, transposed to a row)
    b3     : [1, 1]        f32 SMEM scalar
    out    : [1, 1]        f32 SMEM scalar (final loss)
    acc    : [1]           f32 SMEM scratch (loss accumulator across the grid)
    """
    pid = pl.program_id(0)

    @pl.when(pid == 0)
    def _init():
        acc_ref[0] = 0.0

    # fc layer 1: anchor half is a tiny [1,D]x[D,H1] GEMV shared by every row.
    a_h = jnp.dot(anchor_ref[...], w1a_ref[...],
                  preferred_element_type=jnp.float32)                 # [1, H1p]
    o_h = jnp.dot(other_ref[...], w1b_ref[...],
                  preferred_element_type=jnp.float32)                 # [T, H1p]
    h1 = jnp.maximum(a_h + o_h + b1_ref[...], 0.0)                    # [T, H1p] f32

    # fc layer 2
    h2 = jnp.dot(h1.astype(matmul_dtype), w2_ref[...],
                 preferred_element_type=jnp.float32) + b2_ref[...]
    h2 = jnp.maximum(h2, 0.0)                                         # [T, H2p] f32

    # last_layer: 1-wide Linear as elementwise multiply + lane reduction (XLU)
    z = jnp.sum(h2 * w3_ref[...], axis=-1, keepdims=True) + b3_ref[0, 0]  # [T, 1]

    # BCEWithLogitsLoss, reduction='sum'.  target == 1 only for global row 0:
    #   loss = sum_i softplus(z_i) - z_0   (stable softplus via log1p)
    sp = jnp.maximum(z, 0.0) + jnp.log1p(jnp.exp(-jnp.abs(z)))

    # mask rows past the true N (other was zero-padded to a tile multiple)
    row_ids = pid * tile_n + jax.lax.broadcasted_iota(jnp.int32, z.shape, 0)
    sp = jnp.where(row_ids < n_total, sp, 0.0)

    delta = jnp.sum(sp) - jnp.where(pid == 0, z[0, 0], 0.0)
    acc_ref[0] += delta

    @pl.when(pid == pl.num_programs(0) - 1)
    def _finalize():
        out_ref[0, 0] = acc_ref[0]


def pcl_binary_loss_forward(anchor, positive, negative, params, *,
                            tile_n=DEFAULT_TILE_N, use_bf16=True):
    """JAX/Pallas equivalent of pcl_binary_loss.forward.

    anchor   : [1, D]
    positive : [1, D]
    negative : [Nn, D]
    params   : w1 [2D, H1], b1 [1, H1], w2 [H1, H2], b2 [1, H2],
               w3 [H2, 1],  b3 [1, 1]   (weights stored [in, out])
    returns  : scalar loss (float32)
    """
    f32 = jnp.float32
    mm_dtype = jnp.bfloat16 if use_bf16 else f32
    d = anchor.shape[-1]
    assert params["w1"].shape[0] == 2 * d

    # Rows of the fc input minus the shared anchor half:
    #   row 0 = positive, rows 1.. = negatives  (matches the torch.cat order).
    other = jnp.concatenate([positive, negative], axis=0).astype(mm_dtype)
    n_total = other.shape[0]

    # Zero-pad hidden dims to lane multiples of 128 (semantics preserving:
    # padded h1/h2 columns stay 0 through ReLU and w3's padded entries are 0).
    h1, h2 = params["w1"].shape[1], params["w2"].shape[1]
    h1p, h2p = _round_up(h1, 128), _round_up(h2, 128)
    w1 = jnp.pad(params["w1"].astype(f32), ((0, 0), (0, h1p - h1)))
    b1 = jnp.pad(params["b1"].astype(f32), ((0, 0), (0, h1p - h1)))
    w2 = jnp.pad(params["w2"].astype(f32), ((0, h1p - h1), (0, h2p - h2)))
    b2 = jnp.pad(params["b2"].astype(f32), ((0, 0), (0, h2p - h2)))
    w3_row = jnp.pad(params["w3"].astype(f32).T, ((0, 0), (0, h2p - h2)))  # [1,H2p]
    b3 = params["b3"].astype(f32).reshape(1, 1)

    # Split fc[0]: first D input features belong to the anchor, rest to other.
    w1a = w1[:d, :]                       # f32 (tiny shared GEMV)
    w1b = w1[d:, :].astype(mm_dtype)
    w2 = w2.astype(mm_dtype)
    anchor_f32 = anchor.astype(f32)

    # Row tiling: multiple of 8 sublanes; padded rows are masked in-kernel.
    tile_n = min(tile_n, _round_up(n_total, 8))
    n_pad = _round_up(n_total, tile_n)
    other = jnp.pad(other, ((0, n_pad - n_total), (0, 0)))
    num_tiles = n_pad // tile_n

    kernel = functools.partial(_pcl_loss_kernel, tile_n=tile_n,
                               n_total=n_total, matmul_dtype=mm_dtype)

    out = pl.pallas_call(
        kernel,
        out_shape=jax.ShapeDtypeStruct((1, 1), jnp.float32),
        grid=(num_tiles,),
        in_specs=[
            pl.BlockSpec((1, d), lambda i: (0, 0)),            # anchor (resident)
            pl.BlockSpec((tile_n, d), lambda i: (i, 0)),       # other (row-tiled)
            pl.BlockSpec((d, h1p), lambda i: (0, 0)),          # w1a
            pl.BlockSpec((d, h1p), lambda i: (0, 0)),          # w1b
            pl.BlockSpec((1, h1p), lambda i: (0, 0)),          # b1
            pl.BlockSpec((h1p, h2p), lambda i: (0, 0)),        # w2
            pl.BlockSpec((1, h2p), lambda i: (0, 0)),          # b2
            pl.BlockSpec((1, h2p), lambda i: (0, 0)),          # w3 row
            pl.BlockSpec(memory_space=pltpu.MemorySpace.SMEM), # b3 scalar
        ],
        out_specs=pl.BlockSpec(memory_space=pltpu.MemorySpace.SMEM),
        scratch_shapes=[pltpu.SMEM((1,), jnp.float32)],
        compiler_params=pltpu.CompilerParams(
            dimension_semantics=("arbitrary",)),
    )(anchor_f32, other, w1a, w1b, b1, w2, b2, w3_row, b3)
    return out[0, 0]


def init_params(key, in_dim, kernels):
    """Init mimicking torch.nn.Linear default U(-1/sqrt(fan_in), +1/sqrt(fan_in)).
    Weights stored transposed ([in, out]) so the kernel does x @ W."""
    dims = [in_dim] + list(kernels)
    params = {}
    ks = jax.random.split(key, 2 * len(kernels) + 2)
    for i, (fin, fout) in enumerate(zip(dims[:-1], dims[1:])):
        bound = 1.0 / math.sqrt(fin)
        params[f"w{i+1}"] = jax.random.uniform(
            ks[2 * i], (fin, fout), jnp.float32, -bound, bound)
        params[f"b{i+1}"] = jax.random.uniform(
            ks[2 * i + 1], (1, fout), jnp.float32, -bound, bound)
    fin = kernels[-1]
    bound = 1.0 / math.sqrt(fin)
    i = len(kernels)
    params[f"w{i+1}"] = jax.random.uniform(
        ks[2 * i], (fin, 1), jnp.float32, -bound, bound)
    params[f"b{i+1}"] = jax.random.uniform(
        ks[2 * i + 1], (1, 1), jnp.float32, -bound, bound)
    return params


def _reference(anchor, positive, negative, params):
    """Pure-JAX f32 reference matching the PyTorch module exactly."""
    a = anchor[:, None, :]
    p = positive[:, None, :]
    neg = negative[:, None, :]
    x1 = jnp.concatenate([a, p], axis=2)
    rep_anchor = jnp.tile(a, (negative.shape[0], 1, 1))   # [Nn, 1, D]
    x2 = jnp.concatenate([rep_anchor, neg], axis=2)
    x3 = jnp.concatenate([x1, x2], axis=0)
    x = x3.reshape(x3.shape[0], x3.shape[2])
    h = jnp.maximum(x @ params["w1"] + params["b1"], 0.0)
    h = jnp.maximum(h @ params["w2"] + params["b2"], 0.0)
    logits = (h @ params["w3"] + params["b3"]).reshape(-1)
    target = jnp.zeros_like(logits).at[0].set(1.0)
    per = (jnp.maximum(logits, 0.0) - logits * target
           + jnp.log1p(jnp.exp(-jnp.abs(logits))))
    return jnp.sum(per)


if __name__ == "__main__":
    # Small shapes consistent with the module (feature dim D = in_dim / 2).
    D = 16            # per-sample feature dim
    IN_DIM = 2 * D    # MLP input dim (anchor|other concat)
    KERNELS = [64, 32]
    N_NEG = 7         # number of negatives -> 8 rows total

    key = jax.random.PRNGKey(0)
    k_a, k_p, k_n, k_w = jax.random.split(key, 4)
    anchor = jax.random.normal(k_a, (1, D), jnp.float32)
    positive = jax.random.normal(k_p, (1, D), jnp.float32)
    negative = jax.random.normal(k_n, (N_NEG, D), jnp.float32)

    params = init_params(k_w, IN_DIM, KERNELS)
    ref = _reference(anchor, positive, negative, params)

    # Exact-path check (f32 matmuls) against the f32 reference.
    loss_f32 = jax.block_until_ready(
        pcl_binary_loss_forward(anchor, positive, negative, params,
                                use_bf16=False))
    assert jnp.allclose(loss_f32, ref, rtol=1e-4, atol=1e-4), (loss_f32, ref)

    # Fast path: bf16 matmul operands, f32 accumulation.
    loss_bf16 = jax.block_until_ready(
        pcl_binary_loss_forward(anchor, positive, negative, params,
                                use_bf16=True))
    assert jnp.allclose(loss_bf16, ref, rtol=2e-2, atol=5e-2), (loss_bf16, ref)

    print("KERNEL_OK")
</pallas_src>

<mosaic_0001>
module attributes {stable_mosaic.version = 11 : i64} {
  func.func @_pcl_loss_kernel(%arg0: i32, %arg1: memref<1x16xf32, #tpu.memory_space<vmem>>, %arg2: memref<8x16xf32, #tpu.memory_space<vmem>>, %arg3: memref<16x128xf32, #tpu.memory_space<vmem>>, %arg4: memref<16x128xf32, #tpu.memory_space<vmem>>, %arg5: memref<1x128xf32, #tpu.memory_space<vmem>>, %arg6: memref<128x128xf32, #tpu.memory_space<vmem>>, %arg7: memref<1x128xf32, #tpu.memory_space<vmem>>, %arg8: memref<1x128xf32, #tpu.memory_space<vmem>>, %arg9: memref<1x1xf32, #tpu.memory_space<smem>>, %arg10: memref<1x1xf32, #tpu.memory_space<smem>>, %arg11: memref<1xf32, #tpu.memory_space<smem>>) attributes {dimension_semantics = [#tpu.dimension_semantics<arbitrary>], iteration_bounds = array<i64: 1>, scalar_prefetch = 0 : i64, scratch_operands = 1 : i64, tpu.core_type = #tpu.core_type<tc>, window_params = [{pipeline_mode = #tpu.pipeline_mode<synchronous>, transform_indices = @transform_0, window_bounds = array<i64: 1, 16>}, {transform_indices = @transform_1, window_bounds = array<i64: 8, 16>}, {pipeline_mode = #tpu.pipeline_mode<synchronous>, transform_indices = @transform_2, window_bounds = array<i64: 16, 128>}, {pipeline_mode = #tpu.pipeline_mode<synchronous>, transform_indices = @transform_3, window_bounds = array<i64: 16, 128>}, {pipeline_mode = #tpu.pipeline_mode<synchronous>, transform_indices = @transform_4, window_bounds = array<i64: 1, 128>}, {pipeline_mode = #tpu.pipeline_mode<synchronous>, transform_indices = @transform_5, window_bounds = array<i64: 128, 128>}, {pipeline_mode = #tpu.pipeline_mode<synchronous>, transform_indices = @transform_6, window_bounds = array<i64: 1, 128>}, {pipeline_mode = #tpu.pipeline_mode<synchronous>, transform_indices = @transform_7, window_bounds = array<i64: 1, 128>}, {transform_indices = @transform_8, window_bounds = array<i64: 1, 1>}, {transform_indices = @transform_9, window_bounds = array<i64: 1, 1>}]} {
    %c0_i32 = arith.constant 0 : i32
    %0 = arith.cmpi eq, %arg0, %c0_i32 : i32
    %1 = arith.extui %0 : i1 to i32
    %c0_i32_0 = arith.constant 0 : i32
    %2 = arith.cmpi ne, %1, %c0_i32_0 : i32
    scf.if %2 {
      %cst_34 = arith.constant 0.000000e+00 : f32
      %c0_35 = arith.constant 0 : index
      %62 = memref.load %arg11[%c0_35] : memref<1xf32, #tpu.memory_space<smem>>
      memref.store %cst_34, %arg11[%c0_35] : memref<1xf32, #tpu.memory_space<smem>>
    } else {
    }
    %c0 = arith.constant 0 : index
    %c0_1 = arith.constant 0 : index
    %3 = vector.load %arg1[%c0, %c0_1] : memref<1x16xf32, #tpu.memory_space<vmem>>, vector<1x16xf32>
    %c0_2 = arith.constant 0 : index
    %c0_3 = arith.constant 0 : index
    %4 = vector.load %arg3[%c0_2, %c0_3] : memref<16x128xf32, #tpu.memory_space<vmem>>, vector<16x128xf32>
    %cst = arith.constant dense<0.000000e+00> : vector<1x128xf32>
    %5 = tpu.matmul %3, %4, %cst {dimension_numbers = #tpu.dot_dimension_numbers<[1], [0], [0], [1], [0, 0, 1, 1], [], []>} : vector<1x16xf32>, vector<16x128xf32>, vector<1x128xf32> -> vector<1x128xf32>
    %c0_4 = arith.constant 0 : index
    %c0_5 = arith.constant 0 : index
    %6 = vector.load %arg2[%c0_4, %c0_5] : memref<8x16xf32, #tpu.memory_space<vmem>>, vector<8x16xf32>
    %c0_6 = arith.constant 0 : index
    %c0_7 = arith.constant 0 : index
    %7 = vector.load %arg4[%c0_6, %c0_7] : memref<16x128xf32, #tpu.memory_space<vmem>>, vector<16x128xf32>
    %cst_8 = arith.constant dense<0.000000e+00> : vector<8x128xf32>
    %8 = tpu.matmul %6, %7, %cst_8 {dimension_numbers = #tpu.dot_dimension_numbers<[1], [0], [0], [1], [0, 0, 1, 1], [], []>} : vector<8x16xf32>, vector<16x128xf32>, vector<8x128xf32> -> vector<8x128xf32>
    %9 = vector.broadcast %5 : vector<1x128xf32> to vector<8x128xf32>
    %10 = arith.addf %9, %8 : vector<8x128xf32>
    %c0_9 = arith.constant 0 : index
    %c0_10 = arith.constant 0 : index
    %11 = vector.load %arg5[%c0_9, %c0_10] : memref<1x128xf32, #tpu.memory_space<vmem>>, vector<1x128xf32>
    %12 = vector.broadcast %11 : vector<1x128xf32> to vector<8x128xf32>
    %13 = arith.addf %10, %12 : vector<8x128xf32>
    %cst_11 = arith.constant 0.000000e+00 : f32
    %14 = vector.broadcast %cst_11 : f32 to vector<8x128xf32>
    %15 = arith.maximumf %13, %14 : vector<8x128xf32>
    %c0_12 = arith.constant 0 : index
    %c0_13 = arith.constant 0 : index
    %16 = vector.load %arg6[%c0_12, %c0_13] : memref<128x128xf32, #tpu.memory_space<vmem>>, vector<128x128xf32>
    %cst_14 = arith.constant dense<0.000000e+00> : vector<8x128xf32>
    %17 = tpu.matmul %15, %16, %cst_14 {dimension_numbers = #tpu.dot_dimension_numbers<[1], [0], [0], [1], [0, 0, 1, 1], [], []>} : vector<8x128xf32>, vector<128x128xf32>, vector<8x128xf32> -> vector<8x128xf32>
    %c0_15 = arith.constant 0 : index
    %c0_16 = arith.constant 0 : index
    %18 = vector.load %arg7[%c0_15, %c0_16] : memref<1x128xf32, #tpu.memory_space<vmem>>, vector<1x128xf32>
    %19 = vector.broadcast %18 : vector<1x128xf32> to vector<8x128xf32>
    %20 = arith.addf %17, %19 : vector<8x128xf32>
    %cst_17 = arith.constant 0.000000e+00 : f32
    %21 = vector.broadcast %cst_17 : f32 to vector<8x128xf32>
    %22 = arith.maximumf %20, %21 : vector<8x128xf32>
    %c0_18 = arith.constant 0 : index
    %c0_19 = arith.constant 0 : index
    %23 = vector.load %arg8[%c0_18, %c0_19] : memref<1x128xf32, #tpu.memory_space<vmem>>, vector<1x128xf32>
    %24 = vector.broadcast %23 : vector<1x128xf32> to vector<8x128xf32>
    %25 = arith.mulf %22, %24 : vector<8x128xf32>
    %cst_20 = arith.constant dense<0.000000e+00> : vector<8xf32>
    %26 = vector.multi_reduction <add>, %25, %cst_20 [1] : vector<8x128xf32> to vector<8xf32>
    %27 = vector.shape_cast %26 : vector<8xf32> to vector<8x1xf32>
    %c0_21 = arith.constant 0 : index
    %c0_22 = arith.constant 0 : index
    %28 = memref.load %arg9[%c0_21, %c0_22] : memref<1x1xf32, #tpu.memory_space<smem>>
    %29 = vector.broadcast %28 : f32 to vector<8x1xf32>
    %30 = arith.addf %27, %29 : vector<8x1xf32>
    %cst_23 = arith.constant 0.000000e+00 : f32
    %31 = vector.broadcast %cst_23 : f32 to vector<8x1xf32>
    %32 = arith.maximumf %30, %31 : vector<8x1xf32>
    %33 = math.absf %30 : vector<8x1xf32>
    %cst_24 = arith.constant 0.000000e+00 : f32
    %34 = vector.broadcast %cst_24 : f32 to vector<8x1xf32>
    %35 = arith.subf %34, %33 : vector<8x1xf32>
    %36 = math.exp %35 : vector<8x1xf32>
    %37 = math.log1p %36 : vector<8x1xf32>
    %38 = arith.addf %32, %37 : vector<8x1xf32>
    %c8_i32 = arith.constant 8 : i32
    %39 = arith.muli %arg0, %c8_i32 : i32
    %40 = tpu.iota {dimensions = array<i32: 0>} : vector<8x1xi32>
    %41 = vector.broadcast %39 : i32 to vector<8x1xi32>
    %42 = arith.addi %41, %40 : vector<8x1xi32>
    %c8_i32_25 = arith.constant 8 : i32
    %43 = vector.broadcast %c8_i32_25 : i32 to vector<8x1xi32>
    %44 = arith.cmpi slt, %42, %43 : vector<8x1xi32>
    %cst_26 = arith.constant 0.000000e+00 : f32
    %45 = vector.broadcast %cst_26 : f32 to vector<8x1xf32>
    %46 = arith.select %44, %38, %45 : vector<8x1xi1>, vector<8x1xf32>
    %47 = vector.shape_cast %46 : vector<8x1xf32> to vector<1x8x1xf32>
    %cst_27 = arith.constant dense<0.000000e+00> : vector<1xf32>
    %48 = vector.multi_reduction <add>, %47, %cst_27 [1, 2] : vector<1x8x1xf32> to vector<1xf32>
    %49 = vector.shape_cast %48 : vector<1xf32> to vector<1x1x1xf32>
    %50 = vector.extract %49[0, 0, 0] : f32 from vector<1x1x1xf32>
    %c0_i32_28 = arith.constant 0 : i32
    %51 = arith.cmpi eq, %arg0, %c0_i32_28 : i32
    %52 = vector.extract_strided_slice %30 {offsets = [0, 0], sizes = [1, 1], strides = [1, 1]} : vector<8x1xf32> to vector<1x1xf32>
    %53 = vector.extract %52[0, 0] : f32 from vector<1x1xf32>
    %cst_29 = arith.constant 0.000000e+00 : f32
    %54 = arith.select %51, %53, %cst_29 : f32
    %55 = arith.subf %50, %54 : f32
    %c0_30 = arith.constant 0 : index
    %56 = memref.load %arg11[%c0_30] : memref<1xf32, #tpu.memory_space<smem>>
    %57 = arith.addf %56, %55 : f32
    %c0_31 = arith.constant 0 : index
    %58 = memref.load %arg11[%c0_31] : memref<1xf32, #tpu.memory_space<smem>>
    memref.store %57, %arg11[%c0_31] : memref<1xf32, #tpu.memory_space<smem>>
    %c0_i32_32 = arith.constant 0 : i32
    %59 = arith.cmpi eq, %arg0, %c0_i32_32 : i32
    %60 = arith.extui %59 : i1 to i32
    %c0_i32_33 = arith.constant 0 : i32
    %61 = arith.cmpi ne, %60, %c0_i32_33 : i32
    scf.if %61 {
      %c0_34 = arith.constant 0 : index
      %62 = memref.load %arg11[%c0_34] : memref<1xf32, #tpu.memory_space<smem>>
      %c0_35 = arith.constant 0 : index
      %c0_36 = arith.constant 0 : index
      %63 = memref.load %arg10[%c0_35, %c0_36] : memref<1x1xf32, #tpu.memory_space<smem>>
      memref.store %62, %arg10[%c0_35, %c0_36] : memref<1x1xf32, #tpu.memory_space<smem>>
    } else {
    }
    return
  }
  func.func @transform_0(%arg0: i32) -> (i32, i32) {
    %c0_i32 = arith.constant 0 : i32
    %c0_i32_0 = arith.constant 0 : i32
    %c0_i32_1 = arith.constant 0 : i32
    return %c0_i32, %c0_i32_0 : i32, i32
  }
  func.func @transform_1(%arg0: i32) -> (i32, i32) {
    %c0_i32 = arith.constant 0 : i32
    %c0_i32_0 = arith.constant 0 : i32
    return %arg0, %c0_i32 : i32, i32
  }
  func.func @transform_2(%arg0: i32) -> (i32, i32) {
    %c0_i32 = arith.constant 0 : i32
    %c0_i32_0 = arith.constant 0 : i32
    %c0_i32_1 = arith.constant 0 : i32
    return %c0_i32, %c0_i32_0 : i32, i32
  }
  func.func @transform_3(%arg0: i32) -> (i32, i32) {
    %c0_i32 = arith.constant 0 : i32
    %c0_i32_0 = arith.constant 0 : i32
    %c0_i32_1 = arith.constant 0 : i32
    return %c0_i32, %c0_i32_0 : i32, i32
  }
  func.func @transform_4(%arg0: i32) -> (i32, i32) {
    %c0_i32 = arith.constant 0 : i32
    %c0_i32_0 = arith.constant 0 : i32
    %c0_i32_1 = arith.constant 0 : i32
    return %c0_i32, %c0_i32_0 : i32, i32
  }
  func.func @transform_5(%arg0: i32) -> (i32, i32) {
    %c0_i32 = arith.constant 0 : i32
    %c0_i32_0 = arith.constant 0 : i32
    %c0_i32_1 = arith.constant 0 : i32
    return %c0_i32, %c0_i32_0 : i32, i32
  }
  func.func @transform_6(%arg0: i32) -> (i32, i32) {
    %c0_i32 = arith.constant 0 : i32
    %c0_i32_0 = arith.constant 0 : i32
    %c0_i32_1 = arith.constant 0 : i32
    return %c0_i32, %c0_i32_0 : i32, i32
  }
  func.func @transform_7(%arg0: i32) -> (i32, i32) {
    %c0_i32 = arith.constant 0 : i32
    %c0_i32_0 = arith.constant 0 : i32
    %c0_i32_1 = arith.constant 0 : i32
    return %c0_i32, %c0_i32_0 : i32, i32
  }
  func.func @transform_8(%arg0: i32) -> (i32, i32) {
    %c0_i32 = arith.constant 0 : i32
    %c0_i32_0 = arith.constant 0 : i32
    %c0_i32_1 = arith.constant 0 : i32
    return %c0_i32, %c0_i32_0 : i32, i32
  }
  func.func @transform_9(%arg0: i32) -> (i32, i32) {
    %c0_i32 = arith.constant 0 : i32
    %c0_i32_0 = arith.constant 0 : i32
    %c0_i32_1 = arith.constant 0 : i32
    return %c0_i32, %c0_i32_0 : i32, i32
  }
}

</mosaic_0001>

<llo_original>
// kernel: tpu_custom_call.1
$region0: #{tpu_custom_call.1}
  #allocation0 [shape = 'u32[]', space=smem, size = 0x4, offset = 0x4, fixed_abs, tag = 'smem constant byte address 0x4 - core index']
  #allocation1 [shape = 'u32[144,128]{1,0:T(1,128)}', space=vmem, size = 0x12000, scoped, tag = 'internal scratch']
  #allocation2 [shape = 'f32[1]{0:T(128)}', space=smem, size = 0x200, scoped, tag = 'scratch operand']
  #allocation3 [shape = 'f32[1,1]{1,0:T(1,128)S(6)}', space=smem, size = 0x200, scoped, tag = 'scoped memory for tpu_custom_call.1']
  %s0 = inlined_call_operand.vmem [shape: f32[1,16], index: 0, kind: input, shape index: {}]
  %s1 = inlined_call_operand.hbm [shape: f32[8,16], index: 1, kind: input, shape index: {}]
  %s2 = inlined_call_operand.hbm [shape: f32[16,128], index: 2, kind: input, shape index: {}]
  %s3 = inlined_call_operand.hbm [shape: f32[16,128], index: 3, kind: input, shape index: {}]
  %s4 = inlined_call_operand.vmem [shape: f32[1,128], index: 4, kind: input, shape index: {}]
  %s5 = inlined_call_operand.hbm [shape: f32[128,128], index: 5, kind: input, shape index: {}]
  %s6 = inlined_call_operand.vmem [shape: f32[1,128], index: 6, kind: input, shape index: {}]
  %s7 = inlined_call_operand.vmem [shape: f32[1,128], index: 7, kind: input, shape index: {}]
  %s8 = inlined_call_operand.<no memory space> [shape: f32[1,1], index: 8, kind: input, shape index: {}]
  %s9 = inlined_call_operand.hbm [shape: f32[1,1], index: 9, kind: output, shape index: {}]
  %s10 = sld [smem:[#allocation0]]
  $region70: #{tpu_custom_call.1} parent=0
    _
  %s12 = ssub.s32 1, %s10
  %s13 = scalar_select 0, %s12, %s10
  %14 = sst [smem:[#allocation3]] %s8
  $region1: #{tpu_custom_call.1} parent=0
    #allocation4 [shape = 'u8[4096]{0}', space=vmem, size = 0x1000, scoped, tag = 'input window, operand 1, single buffered']
    #allocation5 [shape = 's32[1]{0}', space=sflag, size = 0x4, scoped, tag = 'scoped memory for tpu_custom_call.1']
    #allocation6 [shape = 's32[1]{0}', space=sflag, size = 0x4, scoped, tag = 'scoped memory for tpu_custom_call.1']
    #allocation7 [shape = 'u8[8192]{0}', space=vmem, size = 0x2000, scoped, tag = 'input window, operand 2, single buffered']
    #allocation8 [shape = 's32[1]{0}', space=sflag, size = 0x4, scoped, tag = 'scoped memory for tpu_custom_call.1']
    #allocation9 [shape = 'u8[8192]{0}', space=vmem, size = 0x2000, scoped, tag = 'input window, operand 3, single buffered']
    #allocation10 [shape = 'u8[65536]{0}', space=vmem, size = 0x10000, scoped, tag = 'input window, operand 5, single buffered']
    #allocation11 [shape = 's32[1]{0}', space=sflag, size = 0x4, scoped, tag = 'scoped memory for tpu_custom_call.1']
    #allocation12 [shape = 'u8[512]{0}', space=smem, size = 0x200, scoped, tag = 'output window, operand 0, single buffered']
    %15 = vsyncpa [#allocation5], 0
    %16 = vsyncpa [#allocation8], 0
    %17 = vsyncpa [#allocation11], 0
    %18 = vsyncpa [#allocation6], 0
    // Predicated region
    $region2: #{tpu_custom_call.1} parent=1 // pred_check
      _
    $region3: #{tpu_custom_call.1} parent=1 // pred_check_branch
      %20 = sbr.rel (0) target = $region5
    $region4: #{tpu_custom_call.1} parent=1 // pred_region
      _
    $region5: #{tpu_custom_call.1} parent=1 // pred_fallthru
      _
    // Predicated region
    $region6: #{tpu_custom_call.1} parent=1 // pred_check
      _
    $region7: #{tpu_custom_call.1} parent=1 // pred_check_branch
      %22 = sbr.rel (0) target = $region9
    $region8: #{tpu_custom_call.1} parent=1 // pred_region
      %s24 = ssub.s32 128, 128
      %25 = vsyncadd [#allocation5], %s24
      %s27 = sshll.u32 [#allocation4], 4
      %s28 = int_to_ptr.vmem [resolvable:$true] %s27
      %30 = dma.hbm_to_vmem [thread:$0]  %s1, 128, %s28, [#allocation5]
    $region9: #{tpu_custom_call.1} parent=1 // pred_fallthru
      _
    // Predicated region
    $region10: #{tpu_custom_call.1} parent=1 // pred_check
      _
    $region11: #{tpu_custom_call.1} parent=1 // pred_check_branch
      %32 = sbr.rel (0) target = $region13
    $region12: #{tpu_custom_call.1} parent=1 // pred_region
      %s34 = ssub.s32 256, 256
      %35 = vsyncadd [#allocation8], %s34
      %s36 = sshll.u32 [#allocation7], 4
      %s37 = int_to_ptr.vmem [resolvable:$true] %s36
      %42 = dma.hbm_to_vmem [thread:$0]  %s2, 256, %s37, [#allocation8], 128, 128, 8
    $region13: #{tpu_custom_call.1} parent=1 // pred_fallthru
      _
    // Predicated region
    $region14: #{tpu_custom_call.1} parent=1 // pred_check
      _
    $region15: #{tpu_custom_call.1} parent=1 // pred_check_branch
      %44 = sbr.rel (0) target = $region17
    $region16: #{tpu_custom_call.1} parent=1 // pred_region
      %s46 = ssub.s32 256, 256
      %47 = vsyncadd [#allocation8], %s46
      %s48 = sshll.u32 [#allocation9], 4
      %s49 = int_to_ptr.vmem [resolvable:$true] %s48
      %54 = dma.hbm_to_vmem [thread:$0]  %s3, 256, %s49, [#allocation8], 128, 128, 8
    $region17: #{tpu_custom_call.1} parent=1 // pred_fallthru
      _
    // Predicated region
    $region18: #{tpu_custom_call.1} parent=1 // pred_check
      _
    $region19: #{tpu_custom_call.1} parent=1 // pred_check_branch
      %56 = sbr.rel (0) target = $region21
    $region20: #{tpu_custom_call.1} parent=1 // pred_region
      _
    $region21: #{tpu_custom_call.1} parent=1 // pred_fallthru
      _
    // Predicated region
    $region22: #{tpu_custom_call.1} parent=1 // pred_check
      _
    $region23: #{tpu_custom_call.1} parent=1 // pred_check_branch
      %58 = sbr.rel (0) target = $region25
    $region24: #{tpu_custom_call.1} parent=1 // pred_region
      %s60 = ssub.s32 2048, 2048
      %61 = vsyncadd [#allocation11], %s60
      %s62 = sshll.u32 [#allocation10], 4
      %s63 = int_to_ptr.vmem [resolvable:$true] %s62
      %68 = dma.hbm_to_vmem [thread:$0]  %s5, 2048, %s63, [#allocation11], 128, 128, 8
    $region25: #{tpu_custom_call.1} parent=1 // pred_fallthru
      _
    // Predicated region
    $region26: #{tpu_custom_call.1} parent=1 // pred_check
      _
    $region27: #{tpu_custom_call.1} parent=1 // pred_check_branch
      %70 = sbr.rel (0) target = $region29
    $region28: #{tpu_custom_call.1} parent=1 // pred_region
      _
    $region29: #{tpu_custom_call.1} parent=1 // pred_fallthru
      _
    // Predicated region
    $region30: #{tpu_custom_call.1} parent=1 // pred_check
      _
    $region31: #{tpu_custom_call.1} parent=1 // pred_check_branch
      %72 = sbr.rel (0) target = $region33
    $region32: #{tpu_custom_call.1} parent=1 // pred_region
      _
    $region33: #{tpu_custom_call.1} parent=1 // pred_fallthru
      _
    // Predicated region
    $region34: #{tpu_custom_call.1} parent=1 // pred_check
      _
    $region35: #{tpu_custom_call.1} parent=1 // pred_check_branch
      %74 = sbr.rel (0) target = $region37
    $region36: #{tpu_custom_call.1} parent=1 // pred_region
      _
    $region37: #{tpu_custom_call.1} parent=1 // pred_fallthru
      _
    // Predicated region
    $region38: #{tpu_custom_call.1} parent=1 // pred_check
      _
    $region39: #{tpu_custom_call.1} parent=1 // pred_check_branch
      %76 = sbr.rel (0) target = $region41
    $region40: #{tpu_custom_call.1} parent=1 // pred_region
      %77 = dma.done [#allocation5], 128
    $region41: #{tpu_custom_call.1} parent=1 // pred_fallthru
      _
    // Predicated region
    $region42: #{tpu_custom_call.1} parent=1 // pred_check
      _
    $region43: #{tpu_custom_call.1} parent=1 // pred_check_branch
      %79 = sbr.rel (0) target = $region45
    $region44: #{tpu_custom_call.1} parent=1 // pred_region
      %80 = dma.done [#allocation8], 256
    $region45: #{tpu_custom_call.1} parent=1 // pred_fallthru
      _
    // Predicated region
    $region46: #{tpu_custom_call.1} parent=1 // pred_check
      _
    $region47: #{tpu_custom_call.1} parent=1 // pred_check_branch
      %82 = sbr.rel (0) target = $region49
    $region48: #{tpu_custom_call.1} parent=1 // pred_region
      %83 = dma.done [#allocation8], 256
    $region49: #{tpu_custom_call.1} parent=1 // pred_fallthru
      _
    // Predicated region
    $region50: #{tpu_custom_call.1} parent=1 // pred_check
      _
    $region51: #{tpu_custom_call.1} parent=1 // pred_check_branch
      %85 = sbr.rel (0) target = $region53
    $region52: #{tpu_custom_call.1} parent=1 // pred_region
      %86 = dma.done [#allocation11], 2048
    $region53: #{tpu_custom_call.1} parent=1 // pred_fallthru
      _
    %p87 = scmp.eq.s32.totalorder 0, 0
    // Predicated region
    $region54: #{tpu_custom_call.1} parent=1 // pred_check
      %p88 = pneg %p87
    $region55: #{tpu_custom_call.1} parent=1 // pred_check_branch
      %90 = sbr.rel (%p88) target = $region57
    $region56: #{tpu_custom_call.1} parent=1 // pred_region
      %s91 = scalar_lea.smem [#allocation2], 0
      %92 = sst [smem:[%s91]] 0.0
    $region57: #{tpu_custom_call.1} parent=1 // pred_fallthru
      _
    %v93 = vld [vmem:[%s0] sm:$0x1]
    %v94 = vld [vmem:[#allocation7] sm:$0xff]
    %v95 = vld [vmem:[#allocation7 + $0x8] sm:$0xff]
    %vm96 = vcmask 130048
    %v98 = vsel %vm96, %v93, 0
    %100 = vmatprep.subr.mxu0 0.0
    %101 = vmatpush1.msra.mxu0 %v94
    %102 = vmatprep.subr.mxu0 0.0
    %103 = vmatpush1.msra.mxu0 %v95
    %104 = vmatprep.subr.mxu0 0.0
    %105 = vmatpush1.msra.mxu0 0.0
    %106 = vmatprep.subr.mxu0 0.0
    %107 = vmatpush1.msra.mxu0 0.0
    %108 = vmatprep.subr.mxu0 0.0
    %109 = vmatpush1.msra.mxu0 0.0
    %110 = vmatprep.subr.mxu0 0.0
    %111 = vmatpush1.msra.mxu0 0.0
    %112 = vmatprep.subr.mxu0 0.0
    %113 = vmatpush1.msra.mxu0 0.0
    %114 = vmatprep.subr.mxu0 0.0
    %115 = vmatpush1.msra.mxu0 0.0
    %116 = vmatprep.subr.mxu0 0.0
    %117 = vmatpush1.msra.mxu0 0.0
    %118 = vmatprep.subr.mxu0 0.0
    %119 = vmatpush1.msra.mxu0 0.0
    %120 = vmatprep.subr.mxu0 0.0
    %121 = vmatpush1.msra.mxu0 0.0
    %122 = vmatprep.subr.mxu0 0.0
    %123 = vmatpush1.msra.mxu0 0.0
    %124 = vmatprep.subr.mxu0 0.0
    %125 = vmatpush1.msra.mxu0 0.0
    %126 = vmatprep.subr.mxu0 0.0
    %127 = vmatpush1.msra.mxu0 0.0
    %128 = vmatprep.subr.mxu0 0.0
    %129 = vmatpush1.msra.mxu0 0.0
    %130 = vmatprep.subr.mxu0 0.0
    %131 = vmatpush1.msra.mxu0 0.0
    %132 = vmatprep.subr.mxu0 0.0
    %133 = vmatpush1.msra.mxu0 0.0
    %134 = vmatprep.subr.mxu0 0.0
    %135 = vmatpush1.msra.mxu0 0.0
    %136 = vmatprep.subr.mxu0 0.0
    %137 = vmatpush1.msra.mxu0 0.0
    %138 = vmatprep.subr.mxu0 0.0
    %139 = vmatpush1.msra.mxu0 0.0
    %140 = vmatprep.subr.mxu0 0.0
    %141 = vmatpush1.msra.mxu0 0.0
    %142 = vmatprep.subr.mxu0 0.0
    %143 = vmatpush1.msra.mxu0 0.0
    %144 = vmatprep.subr.mxu0 0.0
    %145 = vmatpush1.msra.mxu0 0.0
    %146 = vmatprep.subr.mxu0 0.0
    %147 = vmatpush1.msra.mxu0 0.0
    %148 = vmatprep.subr.mxu0 0.0
    %149 = vmatpush1.msra.mxu0 0.0
    %150 = vmatprep.subr.mxu0 0.0
    %151 = vmatpush1.msra.mxu0 0.0
    %152 = vmatprep.subr.mxu0 0.0
    %153 = vmatpush1.msra.mxu0 0.0
    %154 = vmatprep.subr.mxu0 0.0
    %155 = vmatpush1.msra.mxu0 0.0
    %156 = vmatprep.subr.mxu0 0.0
    %157 = vmatpush1.msra.mxu0 0.0
    %158 = vmatprep.subr.mxu0 0.0
    %159 = vmatpush1.msra.mxu0 0.0
    %160 = vmatprep.subr.mxu0 0.0
    %161 = vmatpush1.msra.mxu0 0.0
    %162 = vmatprep.subr.mxu0 0.0
    %163 = vmatpush1.msra.mxu0 0.0
    %164 = vmatprep.mubr.f32.mxu0 0.0
    %165 = vmatmul.mubr.f32.gmra.mrb[0].mxu0 %v98
    %v166 = vpop.f32.mrb[0].mxu0
    %v167 = vadd.f32 0.0, %v166
    %v168 = vpop.f32.mrb[0].mxu0
    %169 = vdwg.mxu0
    %v170 = vld [vmem:[#allocation4] sm:$0xff]
    %v171 = vld [vmem:[#allocation9] sm:$0xff]
    %v172 = vld [vmem:[#allocation9 + $0x8] sm:$0xff]
    %v174 = vsel %vm96, %v170, 0
    %176 = vmatprep.subr.mxu0 0.0
    %177 = vmatpush1.msra.mxu0 %v171
    %178 = vmatprep.subr.mxu0 0.0
    %179 = vmatpush1.msra.mxu0 %v172
    %180 = vmatprep.subr.mxu0 0.0
    %181 = vmatpush1.msra.mxu0 0.0
    %182 = vmatprep.subr.mxu0 0.0
    %183 = vmatpush1.msra.mxu0 0.0
    %184 = vmatprep.subr.mxu0 0.0
    %185 = vmatpush1.msra.mxu0 0.0
    %186 = vmatprep.subr.mxu0 0.0
    %187 = vmatpush1.msra.mxu0 0.0
    %188 = vmatprep.subr.mxu0 0.0
    %189 = vmatpush1.msra.mxu0 0.0
    %190 = vmatprep.subr.mxu0 0.0
    %191 = vmatpush1.msra.mxu0 0.0
    %192 = vmatprep.subr.mxu0 0.0
    %193 = vmatpush1.msra.mxu0 0.0
    %194 = vmatprep.subr.mxu0 0.0
    %195 = vmatpush1.msra.mxu0 0.0
    %196 = vmatprep.subr.mxu0 0.0
    %197 = vmatpush1.msra.mxu0 0.0
    %198 = vmatprep.subr.mxu0 0.0
    %199 = vmatpush1.msra.mxu0 0.0
    %200 = vmatprep.subr.mxu0 0.0
    %201 = vmatpush1.msra.mxu0 0.0
    %202 = vmatprep.subr.mxu0 0.0
    %203 = vmatpush1.msra.mxu0 0.0
    %204 = vmatprep.subr.mxu0 0.0
    %205 = vmatpush1.msra.mxu0 0.0
    %206 = vmatprep.subr.mxu0 0.0
    %207 = vmatpush1.msra.mxu0 0.0
    %208 = vmatprep.subr.mxu0 0.0
    %209 = vmatpush1.msra.mxu0 0.0
    %210 = vmatprep.subr.mxu0 0.0
    %211 = vmatpush1.msra.mxu0 0.0
    %212 = vmatprep.subr.mxu0 0.0
    %213 = vmatpush1.msra.mxu0 0.0
    %214 = vmatprep.subr.mxu0 0.0
    %215 = vmatpush1.msra.mxu0 0.0
    %216 = vmatprep.subr.mxu0 0.0
    %217 = vmatpush1.msra.mxu0 0.0
    %218 = vmatprep.subr.mxu0 0.0
    %219 = vmatpush1.msra.mxu0 0.0
    %220 = vmatprep.subr.mxu0 0.0
    %221 = vmatpush1.msra.mxu0 0.0
    %222 = vmatprep.subr.mxu0 0.0
    %223 = vmatpush1.msra.mxu0 0.0
    %224 = vmatprep.subr.mxu0 0.0
    %225 = vmatpush1.msra.mxu0 0.0
    %226 = vmatprep.subr.mxu0 0.0
    %227 = vmatpush1.msra.mxu0 0.0
    %228 = vmatprep.subr.mxu0 0.0
    %229 = vmatpush1.msra.mxu0 0.0
    %230 = vmatprep.subr.mxu0 0.0
    %231 = vmatpush1.msra.mxu0 0.0
    %232 = vmatprep.subr.mxu0 0.0
    %233 = vmatpush1.msra.mxu0 0.0
    %234 = vmatprep.subr.mxu0 0.0
    %235 = vmatpush1.msra.mxu0 0.0
    %236 = vmatprep.subr.mxu0 0.0
    %237 = vmatpush1.msra.mxu0 0.0
    %238 = vmatprep.subr.mxu0 0.0
    %239 = vmatpush1.msra.mxu0 0.0
    %240 = vmatprep.mubr.f32.mxu0 0.0
    %241 = vmatmul.mubr.f32.gmra.mrb[0].mxu0 %v174
    %v242 = vpop.f32.mrb[0].mxu0
    %v243 = vadd.f32 0.0, %v242
    %v244 = vpop.f32.mrb[0].mxu0
    %245 = vdwg.mxu0
    %v246 = vlaneseq
    %v247 = vshrl.u32 %v246, 7
    %v248 = vsub.s32 0, %v247
    %v249 = vrot.slane %v167, %v248
    %v250 = vadd.f32 %v249, %v243
    %v251 = vld [vmem:[%s4] sm:$0x1]
    %v253 = vlaneseq
    %v254 = vshrl.u32 %v253, 7
    %v255 = vsub.s32 0, %v254
    %v256 = vrot.slane %v251, %v255
    %v258 = vadd.f32 %v250, %v256
    %v259 = vmax.f32 %v258, 0.0
    %v260 = vld [vmem:[#allocation10] sm:$0xff]
    %v261 = vld [vmem:[#allocation10 + $0x8] sm:$0xff]
    %v262 = vld [vmem:[#allocation10 + $0x10] sm:$0xff]
    %v263 = vld [vmem:[#allocation10 + $0x18] sm:$0xff]
    %v264 = vld [vmem:[#allocation10 + $0x20] sm:$0xff]
    %v265 = vld [vmem:[#allocation10 + $0x28] sm:$0xff]
    %v266 = vld [vmem:[#allocation10 + $0x30] sm:$0xff]
    %v267 = vld [vmem:[#allocation10 + $0x38] sm:$0xff]
    %v268 = vld [vmem:[#allocation10 + $0x40] sm:$0xff]
    %v269 = vld [vmem:[#allocation10 + $0x48] sm:$0xff]
    %v270 = vld [vmem:[#allocation10 + $0x50] sm:$0xff]
    %v271 = vld [vmem:[#allocation10 + $0x58] sm:$0xff]
    %v272 = vld [vmem:[#allocation10 + $0x60] sm:$0xff]
    %v273 = vld [vmem:[#allocation10 + $0x68] sm:$0xff]
    %v274 = vld [vmem:[#allocation10 + $0x70] sm:$0xff]
    %v275 = vld [vmem:[#allocation10 + $0x78] sm:$0xff]
    %v276 = vld [vmem:[%s6] sm:$0x1]
    %v278 = vlaneseq
    %v279 = vshrl.u32 %v278, 7
    %v280 = vsub.s32 0, %v279
    %v281 = vrot.slane %v276, %v280
    %283 = vmatprep.subr.mxu0 0.0
    %284 = vmatpush1.msra.mxu0 %v260
    %285 = vmatprep.subr.mxu0 0.0
    %286 = vmatpush1.msra.mxu0 %v261
    %287 = vmatprep.subr.mxu0 0.0
    %288 = vmatpush1.msra.mxu0 %v262
    %289 = vmatprep.subr.mxu0 0.0
    %290 = vmatpush1.msra.mxu0 %v263
    %291 = vmatprep.subr.mxu0 0.0
    %292 = vmatpush1.msra.mxu0 %v264
    %293 = vmatprep.subr.mxu0 0.0
    %294 = vmatpush1.msra.mxu0 %v265
    %295 = vmatprep.subr.mxu0 0.0
    %296 = vmatpush1.msra.mxu0 %v266
    %297 = vmatprep.subr.mxu0 0.0
    %298 = vmatpush1.msra.mxu0 %v267
    %299 = vmatprep.subr.mxu0 0.0
    %300 = vmatpush1.msra.mxu0 %v268
    %301 = vmatprep.subr.mxu0 0.0
    %302 = vmatpush1.msra.mxu0 %v269
    %303 = vmatprep.subr.mxu0 0.0
    %304 = vmatpush1.msra.mxu0 %v270
    %305 = vmatprep.subr.mxu0 0.0
    %306 = vmatpush1.msra.mxu0 %v271
    %307 = vmatprep.subr.mxu0 0.0
    %308 = vmatpush1.msra.mxu0 %v272
    %309 = vmatprep.subr.mxu0 0.0
    %310 = vmatpush1.msra.mxu0 %v273
    %311 = vmatprep.subr.mxu0 0.0
    %312 = vmatpush1.msra.mxu0 %v274
    %313 = vmatprep.subr.mxu0 0.0
    %314 = vmatpush1.msra.mxu0 %v275
    %315 = vmatprep.subr.mxu0 0.0
    %316 = vmatpush1.msra.mxu0 0.0
    %317 = vmatprep.subr.mxu0 0.0
    %318 = vmatpush1.msra.mxu0 0.0
    %319 = vmatprep.subr.mxu0 0.0
    %320 = vmatpush1.msra.mxu0 0.0
    %321 = vmatprep.subr.mxu0 0.0
    %322 = vmatpush1.msra.mxu0 0.0
    %323 = vmatprep.subr.mxu0 0.0
    %324 = vmatpush1.msra.mxu0 0.0
    %325 = vmatprep.subr.mxu0 0.0
    %326 = vmatpush1.msra.mxu0 0.0
    %327 = vmatprep.subr.mxu0 0.0
    %328 = vmatpush1.msra.mxu0 0.0
    %329 = vmatprep.subr.mxu0 0.0
    %330 = vmatpush1.msra.mxu0 0.0
    %331 = vmatprep.subr.mxu0 0.0
    %332 = vmatpush1.msra.mxu0 0.0
    %333 = vmatprep.subr.mxu0 0.0
    %334 = vmatpush1.msra.mxu0 0.0
    %335 = vmatprep.subr.mxu0 0.0
    %336 = vmatpush1.msra.mxu0 0.0
    %337 = vmatprep.subr.mxu0 0.0
    %338 = vmatpush1.msra.mxu0 0.0
    %339 = vmatprep.subr.mxu0 0.0
    %340 = vmatpush1.msra.mxu0 0.0
    %341 = vmatprep.subr.mxu0 0.0
    %342 = vmatpush1.msra.mxu0 0.0
    %343 = vmatprep.subr.mxu0 0.0
    %344 = vmatpush1.msra.mxu0 0.0
    %345 = vmatprep.subr.mxu0 0.0
    %346 = vmatpush1.msra.mxu0 0.0
    %347 = vmatprep.mubr.f32.mxu0 0.0
    %348 = vmatmul.mubr.f32.gmra.mrb[0].mxu0 %v259
    %v349 = vpop.f32.mrb[0].mxu0
    %v350 = vadd.f32 %v281, %v349
    %v351 = vpop.f32.mrb[0].mxu0
    %352 = vdwg.mxu0
    %v353 = vmax.f32 %v350, 0.0
    %v354 = vld [vmem:[%s7] sm:$0x1]
    %v356 = vlaneseq
    %v357 = vshrl.u32 %v356, 7
    %v358 = vsub.s32 0, %v357
    %v359 = vrot.slane %v354, %v358
    %v361 = vmul.f32 %v353, %v359
    %362 = vadd.xlane.f32.xlu0 %v361
    %v363 = vpop.xlane.xlu0 %362
    %s364 = sld [smem:[#allocation3]]
    %v365 = vstv %s364
    %v366 = vadd.f32 %v363, %v365
    %v367 = vmax.f32 %v366, 0.0
    %v368 = vand.u32 2147483647, %v366
    %v369 = vsub.f32 0.0, %v368
    %v370 = vmul.f32 %v369, 1.442695
    %v371 = vpow.pop %v370
    %v372 = vadd.f32 %v371, 1.0
    %v373 = vlog2.pop %v372
    %v374 = vmul.f32 %v373, 0.6931472
    %v375 = vmul.f32 -0.5, %v371
    %v376 = vadd.f32 %v375, 1.0
    %v377 = vmul.f32 %v376, %v371
    %v378 = vand.u32 2147483647, %v371
    %vm379 = vcmp.lt.f32.partialorder %v378, 0.0004427343
    %v380 = vsel %vm379, %v377, %v374
    %v381 = vadd.f32 %v367, %v380
    %s382 = smul.u32 0, 8
    %v383 = vlaneseq
    %v384 = vshrl.u32 %v383, 7
    %v385 = vstv %s382
    %v386 = vadd.s32 %v385, %v384
    %vm387 = vcmp.lt.s32.totalorder %v386, 8
    %v388 = vsel %vm387, %v381, 0.0
    %vm389 = vcmask 7168
    %v390 = vsel %vm389, %v388, 0.0
    %391 = vadd.xlane.f32.xlu0 %v390
    %v392 = vpop.xlane.xlu0 %391
    %v393 = vrot.slane %v392, 4
    %v394 = vadd.f32 %v392, %v393
    %v395 = vrot.slane %v394, 2
    %v396 = vadd.f32 %v394, %v395
    %v397 = vrot.slane %v396, 1
    %v398 = vadd.f32 %v396, %v397
    %s399 = vtos %v398
    %s400 = vtos %v366
    %s401 = scalar_select %p87, %s400, 0.0
    %s402 = ssub.f32 %s399, %s401
    %s403 = sld [smem:[#allocation2]]
    %s404 = sadd.f32 %s403, %s402
    %s405 = scalar_lea.smem [#allocation2], 0
    %406 = sst [smem:[%s405]] %s404
    // Predicated region
    $region58: #{tpu_custom_call.1} parent=1 // pred_check
      %p407 = pneg %p87
    $region59: #{tpu_custom_call.1} parent=1 // pred_check_branch
      %409 = sbr.rel (%p407) target = $region61
    $region60: #{tpu_custom_call.1} parent=1 // pred_region
      %s410 = sld [smem:[#allocation2]]
      %s411 = scalar_lea.smem [#allocation12], 0
      %412 = sst [smem:[%s411]] %s410
    $region61: #{tpu_custom_call.1} parent=1 // pred_fallthru
      _
    // Predicated region
    $region62: #{tpu_custom_call.1} parent=1 // pred_check
      _
    $region63: #{tpu_custom_call.1} parent=1 // pred_check_branch
      %414 = sbr.rel (0) target = $region65
    $region64: #{tpu_custom_call.1} parent=1 // pred_region
      %s416 = ssub.s32 16, 16
      %417 = vsyncadd [#allocation6], %s416
      %420 = dma.smem_to_hbm [#allocation12], 16, %s9, [#allocation6]
    $region65: #{tpu_custom_call.1} parent=1 // pred_fallthru
      _
    // Predicated region
    $region66: #{tpu_custom_call.1} parent=1 // pred_check
      _
    $region67: #{tpu_custom_call.1} parent=1 // pred_check_branch
      %422 = sbr.rel (0) target = $region69
    $region68: #{tpu_custom_call.1} parent=1 // pred_region
      %423 = dma.done [#allocation6], 16
    $region69: #{tpu_custom_call.1} parent=1 // pred_fallthru
      _
    %424 = sfence
    %425 = vsyncpa [#allocation5], 1
    %426 = vsyncpa [#allocation8], 1
    %427 = vsyncpa [#allocation11], 1
    %428 = vsyncpa [#allocation6], 1

</llo_original>
